<compile_context>
chip_gen: v5e
topology: v5e:2x2
jax: 0.10.0
libtpu: 0.0.40
codegen_flags: <defaults>
</compile_context>

<pallas_src>
import functools

import jax
import jax.numpy as jnp
from jax.experimental import pallas as pl
from jax.experimental.pallas import tpu as pltpu


_INV_SQRT2 = 0.7071067811865476  # 1/sqrt(2), avoids a runtime divide


def _gelu_exact(x):
    # torch.nn.GELU default = exact erf-based GELU (computed in f32).
    return 0.5 * x * (1.0 + jax.lax.erf(x * _INV_SQRT2))


def _round_up(x, m):
    return ((x + m - 1) // m) * m


def _pad2d(a, rows, cols):
    pr, pc = rows - a.shape[0], cols - a.shape[1]
    if pr or pc:
        a = jnp.pad(a, ((0, pr), (0, pc)))
    return a


def mlp_kernel(x_ref, w1_ref, b1_ref, w2_ref, b2_ref, o_ref, acc_ref):
    # Grid: (rows_i, hidden_k) with hidden_k last / "arbitrary".
    # x_ref:  (tm, Dp)      row tile (resident across hidden_k)
    # w1_ref: (Dp, tk)      fc1 weight column-chunk
    # b1_ref: (1, tk)       fc1 bias chunk
    # w2_ref: (tk, Dp)      fc2 weight row-chunk
    # b2_ref: (1, Dp)       fc2 bias (whole)
    # o_ref:  (tm, Dp)      output tile (resident across hidden_k)
    # acc_ref:(tm, Dp) f32  partial-sum accumulator
    k = pl.program_id(1)

    @pl.when(k == 0)
    def _():
        # Seed the accumulator with the fc2 bias (added exactly once).
        acc_ref[...] = jnp.broadcast_to(
            b2_ref[...].astype(jnp.float32), acc_ref.shape)

    h = jnp.dot(x_ref[...], w1_ref[...], preferred_element_type=jnp.float32)
    h = h + b1_ref[...].astype(jnp.float32)
    h = _gelu_exact(h)                      # f32 elementwise (safe on v5e too)
    # dropout p=0.0 -> identity (TODO(synk): no RNG dropout needed since drop=0.0)
    acc_ref[...] += jnp.dot(h.astype(w2_ref.dtype), w2_ref[...],
                            preferred_element_type=jnp.float32)

    @pl.when(k == pl.num_programs(1) - 1)
    def _():
        o_ref[...] = acc_ref[...].astype(o_ref.dtype)


def mlp_forward(x, w1, b1, w2, b2, *, tm=256, tk=512, compute_dtype=None):
    """x: [B, N, D_in] -> [B, N, D_in].

    tm: row tile over B*N (8-aligned, ideally a multiple of 128/256).
    tk: hidden-dimension chunk (multiple of 128).
    compute_dtype: e.g. jnp.bfloat16 to run the MXU in bf16 (f32 accumulation).
    """
    B, N, D_in = x.shape
    H = w1.shape[1]
    M = B * N

    # Lane-dense / MXU-friendly padded sizes.
    D_pad = _round_up(D_in, 128)
    tm_eff = min(tm, _round_up(M, 8))
    M_pad = _round_up(M, tm_eff)
    tk_eff = min(tk, _round_up(H, 128))
    H_pad = _round_up(H, tk_eff)

    x2d = _pad2d(x.reshape(M, D_in), M_pad, D_pad)
    w1p = _pad2d(w1, D_pad, H_pad)
    b1p = _pad2d(b1.reshape(1, H), 1, H_pad)
    w2p = _pad2d(w2, H_pad, D_pad)
    b2p = _pad2d(b2.reshape(1, D_in), 1, D_pad)

    if compute_dtype is not None:
        # bf16 operands for v6e/v7x MXU; biases / GELU / accumulation stay f32.
        x2d = x2d.astype(compute_dtype)
        w1p = w1p.astype(compute_dtype)
        w2p = w2p.astype(compute_dtype)

    out = pl.pallas_call(
        mlp_kernel,
        out_shape=jax.ShapeDtypeStruct((M_pad, D_pad), x.dtype),
        grid_spec=pltpu.PrefetchScalarGridSpec(
            num_scalar_prefetch=0,
            grid=(M_pad // tm_eff, H_pad // tk_eff),
            in_specs=[
                pl.BlockSpec((tm_eff, D_pad), lambda i, k: (i, 0)),   # x rows
                pl.BlockSpec((D_pad, tk_eff), lambda i, k: (0, k)),   # w1 cols
                pl.BlockSpec((1, tk_eff), lambda i, k: (0, k)),       # b1 chunk
                pl.BlockSpec((tk_eff, D_pad), lambda i, k: (k, 0)),   # w2 rows
                pl.BlockSpec((1, D_pad), lambda i, k: (0, 0)),        # b2
            ],
            out_specs=pl.BlockSpec((tm_eff, D_pad), lambda i, k: (i, 0)),
            scratch_shapes=[pltpu.VMEM((tm_eff, D_pad), jnp.float32)],
        ),
        compiler_params=pltpu.CompilerParams(
            dimension_semantics=("parallel", "arbitrary"),
            vmem_limit_bytes=48 * 1024 * 1024,
        ),
    )(x2d, w1p, b1p, w2p, b2p)
    return out[:M, :D_in].reshape(B, N, D_in)


def init_params(key, in_feature, hidden_feature, dtype=jnp.float32):
    # Deterministic init mimicking nn.Linear (uniform +/- 1/sqrt(fan_in)).
    k1, k2, k3, k4 = jax.random.split(key, 4)
    lim1 = 1.0 / jnp.sqrt(in_feature)
    lim2 = 1.0 / jnp.sqrt(hidden_feature)
    w1 = jax.random.uniform(k1, (in_feature, hidden_feature), dtype, -lim1, lim1)
    b1 = jax.random.uniform(k2, (hidden_feature,), dtype, -lim1, lim1)
    w2 = jax.random.uniform(k3, (hidden_feature, in_feature), dtype, -lim2, lim2)
    b2 = jax.random.uniform(k4, (in_feature,), dtype, -lim2, lim2)
    return w1, b1, w2, b2


def _reference(x, w1, b1, w2, b2):
    B, N, D_in = x.shape
    h = _gelu_exact(x.reshape(-1, D_in) @ w1 + b1)
    return (h @ w2 + b2).reshape(B, N, D_in)


if __name__ == "__main__":
    key = jax.random.PRNGKey(0)

    # Case 1: small shapes matching the module spec (batch=2, seq=8, D=32, H=64).
    kx, kp, key = jax.random.split(key, 3)
    B, N, D_in, H = 2, 8, 32, 64
    x = jax.random.normal(kx, (B, N, D_in), jnp.float32)
    w1, b1, w2, b2 = init_params(kp, D_in, H)
    out = jax.block_until_ready(mlp_forward(x, w1, b1, w2, b2))
    ref = _reference(x, w1, b1, w2, b2)
    assert jnp.allclose(out, ref, atol=1e-5, rtol=1e-5), "case1 mismatch"

    # Case 2: ragged M + multi-tile grid (exercises padding, accumulator path).
    kx2, kp2, key = jax.random.split(key, 3)
    B2, N2, D2, H2 = 2, 100, 48, 96
    x2 = jax.random.normal(kx2, (B2, N2, D2), jnp.float32)
    p2 = init_params(kp2, D2, H2)
    out2 = jax.block_until_ready(mlp_forward(x2, *p2, tm=64, tk=128))
    ref2 = _reference(x2, *p2)
    assert jnp.allclose(out2, ref2, atol=1e-5, rtol=1e-5), "case2 mismatch"

    print("KERNEL_OK")
</pallas_src>

<mosaic_0001>
module attributes {stable_mosaic.version = 11 : i64} {
  func.func @mlp_kernel(%arg0: i32, %arg1: i32, %arg2: memref<16x128xf32, #tpu.memory_space<vmem>>, %arg3: memref<128x128xf32, #tpu.memory_space<vmem>>, %arg4: memref<1x128xf32, #tpu.memory_space<vmem>>, %arg5: memref<128x128xf32, #tpu.memory_space<vmem>>, %arg6: memref<1x128xf32, #tpu.memory_space<vmem>>, %arg7: memref<16x128xf32, #tpu.memory_space<vmem>>, %arg8: memref<16x128xf32, #tpu.memory_space<vmem>>) attributes {dimension_semantics = [#tpu.dimension_semantics<parallel>, #tpu.dimension_semantics<arbitrary>], iteration_bounds = array<i64: 1, 1>, scalar_prefetch = 0 : i64, scratch_operands = 1 : i64, tpu.core_type = #tpu.core_type<tc>, window_params = [{transform_indices = @transform_0, window_bounds = array<i64: 16, 128>}, {transform_indices = @transform_1, window_bounds = array<i64: 128, 128>}, {transform_indices = @transform_2, window_bounds = array<i64: 1, 128>}, {transform_indices = @transform_3, window_bounds = array<i64: 128, 128>}, {pipeline_mode = #tpu.pipeline_mode<synchronous>, transform_indices = @transform_4, window_bounds = array<i64: 1, 128>}, {transform_indices = @transform_5, window_bounds = array<i64: 16, 128>}]} {
    %c0_i32 = arith.constant 0 : i32
    %0 = arith.cmpi eq, %arg1, %c0_i32 : i32
    %1 = arith.extui %0 : i1 to i32
    %c0_i32_0 = arith.constant 0 : i32
    %2 = arith.cmpi ne, %1, %c0_i32_0 : i32
    scf.if %2 {
      %c0_18 = arith.constant 0 : index
      %c0_19 = arith.constant 0 : index
      %25 = vector.load %arg6[%c0_18, %c0_19] : memref<1x128xf32, #tpu.memory_space<vmem>>, vector<1x128xf32>
      %26 = vector.shape_cast %25 : vector<1x128xf32> to vector<1x128xf32>
      %27 = vector.broadcast %26 : vector<1x128xf32> to vector<16x128xf32>
      %c0_20 = arith.constant 0 : index
      %c0_21 = arith.constant 0 : index
      %28 = vector.load %arg8[%c0_20, %c0_21] : memref<16x128xf32, #tpu.memory_space<vmem>>, vector<16x128xf32>
      tpu.vector_store %arg8[%c0_20, %c0_21], %27 {strides = array<i32>} : memref<16x128xf32, #tpu.memory_space<vmem>>, vector<16x128xf32>,
    } else {
    }
    %c0 = arith.constant 0 : index
    %c0_1 = arith.constant 0 : index
    %3 = vector.load %arg2[%c0, %c0_1] : memref<16x128xf32, #tpu.memory_space<vmem>>, vector<16x128xf32>
    %c0_2 = arith.constant 0 : index
    %c0_3 = arith.constant 0 : index
    %4 = vector.load %arg3[%c0_2, %c0_3] : memref<128x128xf32, #tpu.memory_space<vmem>>, vector<128x128xf32>
    %cst = arith.constant dense<0.000000e+00> : vector<16x128xf32>
    %5 = tpu.matmul %3, %4, %cst {dimension_numbers = #tpu.dot_dimension_numbers<[1], [0], [0], [1], [0, 0, 1, 1], [], []>} : vector<16x128xf32>, vector<128x128xf32>, vector<16x128xf32> -> vector<16x128xf32>
    %c0_4 = arith.constant 0 : index
    %c0_5 = arith.constant 0 : index
    %6 = vector.load %arg4[%c0_4, %c0_5] : memref<1x128xf32, #tpu.memory_space<vmem>>, vector<1x128xf32>
    %7 = vector.broadcast %6 : vector<1x128xf32> to vector<16x128xf32>
    %8 = arith.addf %5, %7 : vector<16x128xf32>
    %cst_6 = arith.constant 5.000000e-01 : f32
    %9 = vector.broadcast %cst_6 : f32 to vector<16x128xf32>
    %10 = arith.mulf %9, %8 : vector<16x128xf32>
    %cst_7 = arith.constant 0.707106769 : f32
    %11 = vector.broadcast %cst_7 : f32 to vector<16x128xf32>
    %12 = arith.mulf %8, %11 : vector<16x128xf32>
    %13 = math.erf %12 : vector<16x128xf32>
    %cst_8 = arith.constant 1.000000e+00 : f32
    %14 = vector.broadcast %cst_8 : f32 to vector<16x128xf32>
    %15 = arith.addf %14, %13 : vector<16x128xf32>
    %16 = arith.mulf %10, %15 : vector<16x128xf32>
    %c0_9 = arith.constant 0 : index
    %c0_10 = arith.constant 0 : index
    %17 = vector.load %arg8[%c0_9, %c0_10] : memref<16x128xf32, #tpu.memory_space<vmem>>, vector<16x128xf32>
    %c0_11 = arith.constant 0 : index
    %c0_12 = arith.constant 0 : index
    %18 = vector.load %arg5[%c0_11, %c0_12] : memref<128x128xf32, #tpu.memory_space<vmem>>, vector<128x128xf32>
    %cst_13 = arith.constant dense<0.000000e+00> : vector<16x128xf32>
    %19 = tpu.matmul %16, %18, %cst_13 {dimension_numbers = #tpu.dot_dimension_numbers<[1], [0], [0], [1], [0, 0, 1, 1], [], []>} : vector<16x128xf32>, vector<128x128xf32>, vector<16x128xf32> -> vector<16x128xf32>
    %20 = arith.addf %17, %19 : vector<16x128xf32>
    %c0_14 = arith.constant 0 : index
    %c0_15 = arith.constant 0 : index
    %21 = vector.load %arg8[%c0_14, %c0_15] : memref<16x128xf32, #tpu.memory_space<vmem>>, vector<16x128xf32>
    tpu.vector_store %arg8[%c0_14, %c0_15], %20 {strides = array<i32>} : memref<16x128xf32, #tpu.memory_space<vmem>>, vector<16x128xf32>,
    %c0_i32_16 = arith.constant 0 : i32
    %22 = arith.cmpi eq, %arg1, %c0_i32_16 : i32
    %23 = arith.extui %22 : i1 to i32
    %c0_i32_17 = arith.constant 0 : i32
    %24 = arith.cmpi ne, %23, %c0_i32_17 : i32
    scf.if %24 {
      %c0_18 = arith.constant 0 : index
      %c0_19 = arith.constant 0 : index
      %25 = vector.load %arg8[%c0_18, %c0_19] : memref<16x128xf32, #tpu.memory_space<vmem>>, vector<16x128xf32>
      %c0_20 = arith.constant 0 : index
      %c0_21 = arith.constant 0 : index
      %26 = vector.load %arg7[%c0_20, %c0_21] : memref<16x128xf32, #tpu.memory_space<vmem>>, vector<16x128xf32>
      tpu.vector_store %arg7[%c0_20, %c0_21], %25 {strides = array<i32>} : memref<16x128xf32, #tpu.memory_space<vmem>>, vector<16x128xf32>,
    } else {
    }
    return
  }
  func.func @transform_0(%arg0: i32, %arg1: i32) -> (i32, i32) {
    %c0_i32 = arith.constant 0 : i32
    %c0_i32_0 = arith.constant 0 : i32
    return %arg0, %c0_i32 : i32, i32
  }
  func.func @transform_1(%arg0: i32, %arg1: i32) -> (i32, i32) {
    %c0_i32 = arith.constant 0 : i32
    %c0_i32_0 = arith.constant 0 : i32
    return %c0_i32, %arg1 : i32, i32
  }
  func.func @transform_2(%arg0: i32, %arg1: i32) -> (i32, i32) {
    %c0_i32 = arith.constant 0 : i32
    %c0_i32_0 = arith.constant 0 : i32
    return %c0_i32, %arg1 : i32, i32
  }
  func.func @transform_3(%arg0: i32, %arg1: i32) -> (i32, i32) {
    %c0_i32 = arith.constant 0 : i32
    %c0_i32_0 = arith.constant 0 : i32
    return %arg1, %c0_i32 : i32, i32
  }
  func.func @transform_4(%arg0: i32, %arg1: i32) -> (i32, i32) {
    %c0_i32 = arith.constant 0 : i32
    %c0_i32_0 = arith.constant 0 : i32
    %c0_i32_1 = arith.constant 0 : i32
    return %c0_i32, %c0_i32_0 : i32, i32
  }
  func.func @transform_5(%arg0: i32, %arg1: i32) -> (i32, i32) {
    %c0_i32 = arith.constant 0 : i32
    %c0_i32_0 = arith.constant 0 : i32
    return %arg0, %c0_i32 : i32, i32
  }
}

</mosaic_0001>

<llo_original>
// kernel: tpu_custom_call.1
$region0: #{tpu_custom_call.1}
  #allocation0 [shape = 'u32[]', space=smem, size = 0x4, offset = 0x4, fixed_abs, tag = 'smem constant byte address 0x4 - core index']
  #allocation1 [shape = 'u32[72,128]{1,0:T(1,128)}', space=vmem, size = 0x9000, scoped, tag = 'internal scratch']
  #allocation2 [shape = 'f32[16,128]{1,0:T(8,128)}', space=vmem, size = 0x2000, scoped, tag = 'scratch operand']
  %s0 = inlined_call_operand.hbm [shape: f32[16,128], index: 0, kind: input, shape index: {}]
  %s1 = inlined_call_operand.hbm [shape: f32[128,128], index: 1, kind: input, shape index: {}]
  %s2 = inlined_call_operand.vmem [shape: f32[1,128], index: 2, kind: input, shape index: {}]
  %s3 = inlined_call_operand.hbm [shape: f32[128,128], index: 3, kind: input, shape index: {}]
  %s4 = inlined_call_operand.vmem [shape: f32[1,128], index: 4, kind: input, shape index: {}]
  %s5 = inlined_call_operand.hbm [shape: f32[16,128], index: 5, kind: output, shape index: {}]
  %s6 = sld [smem:[#allocation0]]
  $region50: #{tpu_custom_call.1} parent=0
    _
  %s8 = ssub.s32 1, %s6
  %s9 = scalar_select 0, %s8, %s6
  $region1: #{tpu_custom_call.1} parent=0
    #allocation3 [shape = 'u8[8192]{0}', space=vmem, size = 0x2000, scoped, tag = 'input window, operand 0, single buffered']
    #allocation4 [shape = 's32[1]{0}', space=sflag, size = 0x4, scoped, tag = 'scoped memory for tpu_custom_call.1']
    #allocation5 [shape = 's32[1]{0}', space=sflag, size = 0x4, scoped, tag = 'scoped memory for tpu_custom_call.1']
    #allocation6 [shape = 'u8[65536]{0}', space=vmem, size = 0x10000, scoped, tag = 'input window, operand 1, single buffered']
    #allocation7 [shape = 's32[1]{0}', space=sflag, size = 0x4, scoped, tag = 'scoped memory for tpu_custom_call.1']
    #allocation8 [shape = 'u8[65536]{0}', space=vmem, size = 0x10000, scoped, tag = 'input window, operand 3, single buffered']
    #allocation9 [shape = 'u8[8192]{0}', space=vmem, size = 0x2000, scoped, tag = 'output window, operand 0, single buffered']
    %10 = vsyncpa [#allocation4], 0
    %11 = vsyncpa [#allocation7], 0
    %12 = vsyncpa [#allocation5], 0
    // Predicated region
    $region2: #{tpu_custom_call.1} parent=1 // pred_check
      _
    $region3: #{tpu_custom_call.1} parent=1 // pred_check_branch
      %14 = sbr.rel (0) target = $region5
    $region4: #{tpu_custom_call.1} parent=1 // pred_region
      %16 = vsyncadd [#allocation4], 0
      %s17 = sshll.u32 %s0, 4
      %s18 = int_to_ptr.hbm [resolvable:$true] %s17
      %s19 = sshll.u32 [#allocation3], 4
      %s20 = int_to_ptr.vmem [resolvable:$true] %s19
      %25 = dma.hbm_to_vmem [thread:$0]  %s18, 256, %s20, [#allocation4], 128, 128, 8
    $region5: #{tpu_custom_call.1} parent=1 // pred_fallthru
      _
    // Predicated region
    $region6: #{tpu_custom_call.1} parent=1 // pred_check
      _
    $region7: #{tpu_custom_call.1} parent=1 // pred_check_branch
      %27 = sbr.rel (0) target = $region9
    $region8: #{tpu_custom_call.1} parent=1 // pred_region
      %29 = vsyncadd [#allocation7], 0
      %s30 = sshll.u32 %s1, 4
      %s31 = int_to_ptr.hbm [resolvable:$true] %s30
      %s32 = sshll.u32 [#allocation6], 4
      %s33 = int_to_ptr.vmem [resolvable:$true] %s32
      %38 = dma.hbm_to_vmem [thread:$0]  %s31, 2048, %s33, [#allocation7], 128, 128, 8
    $region9: #{tpu_custom_call.1} parent=1 // pred_fallthru
      _
    // Predicated region
    $region10: #{tpu_custom_call.1} parent=1 // pred_check
      _
    $region11: #{tpu_custom_call.1} parent=1 // pred_check_branch
      %40 = sbr.rel (0) target = $region13
    $region12: #{tpu_custom_call.1} parent=1 // pred_region
      _
    $region13: #{tpu_custom_call.1} parent=1 // pred_fallthru
      _
    // Predicated region
    $region14: #{tpu_custom_call.1} parent=1 // pred_check
      _
    $region15: #{tpu_custom_call.1} parent=1 // pred_check_branch
      %42 = sbr.rel (0) target = $region17
    $region16: #{tpu_custom_call.1} parent=1 // pred_region
      %44 = vsyncadd [#allocation7], 0
      %s45 = sshll.u32 %s3, 4
      %s46 = int_to_ptr.hbm [resolvable:$true] %s45
      %s47 = sshll.u32 [#allocation8], 4
      %s48 = int_to_ptr.vmem [resolvable:$true] %s47
      %53 = dma.hbm_to_vmem [thread:$0]  %s46, 2048, %s48, [#allocation7], 128, 128, 8
    $region17: #{tpu_custom_call.1} parent=1 // pred_fallthru
      _
    // Predicated region
    $region18: #{tpu_custom_call.1} parent=1 // pred_check
      _
    $region19: #{tpu_custom_call.1} parent=1 // pred_check_branch
      %55 = sbr.rel (0) target = $region21
    $region20: #{tpu_custom_call.1} parent=1 // pred_region
      _
    $region21: #{tpu_custom_call.1} parent=1 // pred_fallthru
      _
    // Predicated region
    $region22: #{tpu_custom_call.1} parent=1 // pred_check
      _
    $region23: #{tpu_custom_call.1} parent=1 // pred_check_branch
      %57 = sbr.rel (0) target = $region25
    $region24: #{tpu_custom_call.1} parent=1 // pred_region
      %59 = dma.done [#allocation4], 256
    $region25: #{tpu_custom_call.1} parent=1 // pred_fallthru
      _
    // Predicated region
    $region26: #{tpu_custom_call.1} parent=1 // pred_check
      _
    $region27: #{tpu_custom_call.1} parent=1 // pred_check_branch
      %61 = sbr.rel (0) target = $region29
    $region28: #{tpu_custom_call.1} parent=1 // pred_region
      %63 = dma.done [#allocation7], 2048
    $region29: #{tpu_custom_call.1} parent=1 // pred_fallthru
      _
    // Predicated region
    $region30: #{tpu_custom_call.1} parent=1 // pred_check
      _
    $region31: #{tpu_custom_call.1} parent=1 // pred_check_branch
      %65 = sbr.rel (0) target = $region33
    $region32: #{tpu_custom_call.1} parent=1 // pred_region
      %67 = dma.done [#allocation7], 2048
    $region33: #{tpu_custom_call.1} parent=1 // pred_fallthru
      _
    %p68 = scmp.eq.s32.totalorder 0, 0
    // Predicated region
    $region34: #{tpu_custom_call.1} parent=1 // pred_check
      %p69 = pneg %p68
    $region35: #{tpu_custom_call.1} parent=1 // pred_check_branch
      %71 = sbr.rel (%p69) target = $region37
    $region36: #{tpu_custom_call.1} parent=1 // pred_region
      %v72 = vld [vmem:[%s4] sm:$0x1]
      %v74 = vperm.slane %v72, 0
      %76 = vst [vmem:[#allocation2] sm:$0xff] %v74
      %77 = vst [vmem:[#allocation2 + $0x8] sm:$0xff] %v74
    $region37: #{tpu_custom_call.1} parent=1 // pred_fallthru
      _
    %v78 = vld [vmem:[#allocation3] sm:$0xff]
    %v79 = vld [vmem:[#allocation3 + $0x8] sm:$0xff]
    %v80 = vld [vmem:[#allocation6] sm:$0xff]
    %v81 = vld [vmem:[#allocation6 + $0x8] sm:$0xff]
    %v82 = vld [vmem:[#allocation6 + $0x10] sm:$0xff]
    %v83 = vld [vmem:[#allocation6 + $0x18] sm:$0xff]
    %v84 = vld [vmem:[#allocation6 + $0x20] sm:$0xff]
    %v85 = vld [vmem:[#allocation6 + $0x28] sm:$0xff]
    %v86 = vld [vmem:[#allocation6 + $0x30] sm:$0xff]
    %v87 = vld [vmem:[#allocation6 + $0x38] sm:$0xff]
    %v88 = vld [vmem:[#allocation6 + $0x40] sm:$0xff]
    %v89 = vld [vmem:[#allocation6 + $0x48] sm:$0xff]
    %v90 = vld [vmem:[#allocation6 + $0x50] sm:$0xff]
    %v91 = vld [vmem:[#allocation6 + $0x58] sm:$0xff]
    %v92 = vld [vmem:[#allocation6 + $0x60] sm:$0xff]
    %v93 = vld [vmem:[#allocation6 + $0x68] sm:$0xff]
    %v94 = vld [vmem:[#allocation6 + $0x70] sm:$0xff]
    %v95 = vld [vmem:[#allocation6 + $0x78] sm:$0xff]
    %v96 = vld [vmem:[%s2] sm:$0x1]
    %v98 = vperm.slane %v96, 0
    %100 = vmatpush.msra.mxu0 %v95
    %101 = vmatpush.msra.mxu0 %v94
    %102 = vmatpush.msra.mxu0 %v93
    %103 = vmatpush.msra.mxu0 %v92
    %104 = vmatpush.msra.mxu0 %v91
    %105 = vmatpush.msra.mxu0 %v90
    %106 = vmatpush.msra.mxu0 %v89
    %107 = vmatpush.msra.mxu0 %v88
    %108 = vmatpush.msra.mxu0 %v87
    %109 = vmatpush.msra.mxu0 %v86
    %110 = vmatpush.msra.mxu0 %v85
    %111 = vmatpush.msra.mxu0 %v84
    %112 = vmatpush.msra.mxu0 %v83
    %113 = vmatpush.msra.mxu0 %v82
    %114 = vmatpush.msra.mxu0 %v81
    %115 = vmatpush.msra.mxu0 %v80
    %116 = vmatmul.f32.gmra.mxu0 %v78
    %v117 = vpop.f32.mrf.mxu0
    %v118 = vadd.f32 %v98, %v117
    %119 = vmatmul.f32.gmra.mxu0 %v79
    %v120 = vpop.f32.mrf.mxu0
    %v121 = vadd.f32 %v98, %v120
    %122 = vdwg.mxu0
    %v123 = vmul.f32 %v118, 0.5
    %v124 = vmul.f32 %v121, 0.5
    %v125 = vmul.f32 %v118, 0.70710677
    %v126 = vmul.f32 %v121, 0.70710677
    %v127 = vmul.f32 %v125, %v125
    %v128 = vmin.f32 16.0, %v127
    %v129 = vmul.f32 %v128, 2.1237322e-06
    %v130 = vadd.f32 %v129, 0.00028619796
    %v131 = vmul.f32 %v128, %v130
    %v132 = vadd.f32 %v131, 0.0036580483
    %v133 = vmul.f32 %v128, %v132
    %v134 = vadd.f32 %v133, 0.05243302
    %v135 = vmul.f32 %v128, %v134
    %v136 = vadd.f32 %v135, 0.18741608
    %v137 = vmul.f32 %v128, %v136
    %v138 = vadd.f32 %v137, 1.1283791
    %v139 = vmul.f32 %v125, %v138
    %v140 = vmul.f32 %v128, 3.8918573e-05
    %v141 = vadd.f32 %v140, 0.001143296
    %v142 = vmul.f32 %v128, %v141
    %v143 = vadd.f32 %v142, 0.014752088
    %v144 = vmul.f32 %v128, %v143
    %v145 = vadd.f32 %v144, 0.112945676
    %v146 = vmul.f32 %v128, %v145
    %v147 = vadd.f32 %v146, 0.4994258
    %v148 = vmul.f32 %v128, %v147
    %v149 = vadd.f32 %v148, 1.0
    %v150 = vrcp.pop %v149
    %v151 = vmul.f32 %v149, %v150
    %v152 = vsub.f32 1.0, %v151
    %v153 = vmul.f32 %v150, %v152
    %v154 = vadd.f32 %v150, %v153
    %vm155 = vweird.f32 %v149
    %vm156 = vweird.f32 %v150
    %vm157 = vmor %vm155, %vm156
    %v158 = vsel %vm157, %v150, %v154
    %v159 = vand.u32 2147483647, %v149
    %vm160 = vcmp.eq.f32.partialorder %v159, 8.507059e+37
    %v161 = vand.u32 %v149, 2147483648
    %v162 = vor.u32 1.1754944e-38, %v161
    %v163 = vsel %vm160, %v162, %v158
    %v164 = vmul.f32 %v139, %v163
    %v165 = vmin.f32 %v164, 1.0
    %v166 = vmax.f32 %v165, -1.0
    %v167 = vmul.f32 %v126, %v126
    %v168 = vmin.f32 16.0, %v167
    %v169 = vmul.f32 %v168, 2.1237322e-06
    %v170 = vadd.f32 %v169, 0.00028619796
    %v171 = vmul.f32 %v168, %v170
    %v172 = vadd.f32 %v171, 0.0036580483
    %v173 = vmul.f32 %v168, %v172
    %v174 = vadd.f32 %v173, 0.05243302
    %v175 = vmul.f32 %v168, %v174
    %v176 = vadd.f32 %v175, 0.18741608
    %v177 = vmul.f32 %v168, %v176
    %v178 = vadd.f32 %v177, 1.1283791
    %v179 = vmul.f32 %v126, %v178
    %v180 = vmul.f32 %v168, 3.8918573e-05
    %v181 = vadd.f32 %v180, 0.001143296
    %v182 = vmul.f32 %v168, %v181
    %v183 = vadd.f32 %v182, 0.014752088
    %v184 = vmul.f32 %v168, %v183
    %v185 = vadd.f32 %v184, 0.112945676
    %v186 = vmul.f32 %v168, %v185
    %v187 = vadd.f32 %v186, 0.4994258
    %v188 = vmul.f32 %v168, %v187
    %v189 = vadd.f32 %v188, 1.0
    %v190 = vrcp.pop %v189
    %v191 = vmul.f32 %v189, %v190
    %v192 = vsub.f32 1.0, %v191
    %v193 = vmul.f32 %v190, %v192
    %v194 = vadd.f32 %v190, %v193
    %vm195 = vweird.f32 %v189
    %vm196 = vweird.f32 %v190
    %vm197 = vmor %vm195, %vm196
    %v198 = vsel %vm197, %v190, %v194
    %v199 = vand.u32 2147483647, %v189
    %vm200 = vcmp.eq.f32.partialorder %v199, 8.507059e+37
    %v201 = vand.u32 %v189, 2147483648
    %v202 = vor.u32 1.1754944e-38, %v201
    %v203 = vsel %vm200, %v202, %v198
    %v204 = vmul.f32 %v179, %v203
    %v205 = vmin.f32 %v204, 1.0
    %v206 = vmax.f32 %v205, -1.0
    %v207 = vadd.f32 %v166, 1.0
    %v208 = vadd.f32 %v206, 1.0
    %v209 = vmul.f32 %v123, %v207
    %v210 = vmul.f32 %v124, %v208
    %v211 = vld [vmem:[#allocation2] sm:$0xff]
    %v212 = vld [vmem:[#allocation2 + $0x8] sm:$0xff]
    %v213 = vld [vmem:[#allocation8] sm:$0xff]
    %v214 = vld [vmem:[#allocation8 + $0x8] sm:$0xff]
    %v215 = vld [vmem:[#allocation8 + $0x10] sm:$0xff]
    %v216 = vld [vmem:[#allocation8 + $0x18] sm:$0xff]
    %v217 = vld [vmem:[#allocation8 + $0x20] sm:$0xff]
    %v218 = vld [vmem:[#allocation8 + $0x28] sm:$0xff]
    %v219 = vld [vmem:[#allocation8 + $0x30] sm:$0xff]
    %v220 = vld [vmem:[#allocation8 + $0x38] sm:$0xff]
    %v221 = vld [vmem:[#allocation8 + $0x40] sm:$0xff]
    %v222 = vld [vmem:[#allocation8 + $0x48] sm:$0xff]
    %v223 = vld [vmem:[#allocation8 + $0x50] sm:$0xff]
    %v224 = vld [vmem:[#allocation8 + $0x58] sm:$0xff]
    %v225 = vld [vmem:[#allocation8 + $0x60] sm:$0xff]
    %v226 = vld [vmem:[#allocation8 + $0x68] sm:$0xff]
    %v227 = vld [vmem:[#allocation8 + $0x70] sm:$0xff]
    %v228 = vld [vmem:[#allocation8 + $0x78] sm:$0xff]
    %229 = vmatpush.msra.mxu0 %v228
    %230 = vmatpush.msra.mxu0 %v227
    %231 = vmatpush.msra.mxu0 %v226
    %232 = vmatpush.msra.mxu0 %v225
    %233 = vmatpush.msra.mxu0 %v224
    %234 = vmatpush.msra.mxu0 %v223
    %235 = vmatpush.msra.mxu0 %v222
    %236 = vmatpush.msra.mxu0 %v221
    %237 = vmatpush.msra.mxu0 %v220
    %238 = vmatpush.msra.mxu0 %v219
    %239 = vmatpush.msra.mxu0 %v218
    %240 = vmatpush.msra.mxu0 %v217
    %241 = vmatpush.msra.mxu0 %v216
    %242 = vmatpush.msra.mxu0 %v215
    %243 = vmatpush.msra.mxu0 %v214
    %244 = vmatpush.msra.mxu0 %v213
    %245 = vmatmul.f32.gmra.mxu0 %v209
    %v246 = vpop.f32.mrf.mxu0
    %v247 = vadd.f32 0.0, %v246
    %248 = vmatmul.f32.gmra.mxu0 %v210
    %v249 = vpop.f32.mrf.mxu0
    %v250 = vadd.f32 0.0, %v249
    %251 = vdwg.mxu0
    %v252 = vadd.f32 %v211, %v247
    %v253 = vadd.f32 %v212, %v250
    %254 = vst [vmem:[#allocation2] sm:$0xff] %v252
    %255 = vst [vmem:[#allocation2 + $0x8] sm:$0xff] %v253
    // Predicated region
    $region38: #{tpu_custom_call.1} parent=1 // pred_check
      %p256 = pneg %p68
    $region39: #{tpu_custom_call.1} parent=1 // pred_check_branch
      %258 = sbr.rel (%p256) target = $region41
    $region40: #{tpu_custom_call.1} parent=1 // pred_region
      %v259 = vld [vmem:[#allocation2] sm:$0xff]
      %v260 = vld [vmem:[#allocation2 + $0x8] sm:$0xff]
      %261 = vst [vmem:[#allocation9] sm:$0xff] %v259
      %262 = vst [vmem:[#allocation9 + $0x8] sm:$0xff] %v260
    $region41: #{tpu_custom_call.1} parent=1 // pred_fallthru
      _
    // Predicated region
    $region42: #{tpu_custom_call.1} parent=1 // pred_check
      _
    $region43: #{tpu_custom_call.1} parent=1 // pred_check_branch
      %264 = sbr.rel (0) target = $region45
    $region44: #{tpu_custom_call.1} parent=1 // pred_region
      %266 = vsyncadd [#allocation5], 0
      %s267 = sshll.u32 [#allocation9], 4
      %s268 = int_to_ptr.vmem [resolvable:$true] %s267
      %s269 = sshll.u32 %s5, 4
      %s270 = int_to_ptr.hbm [resolvable:$true] %s269
      %275 = dma.vmem_to_hbm [thread:$0]  %s268, 256, %s270, [#allocation5], 128, 128, 8
    $region45: #{tpu_custom_call.1} parent=1 // pred_fallthru
      _
    // Predicated region
    $region46: #{tpu_custom_call.1} parent=1 // pred_check
      _
    $region47: #{tpu_custom_call.1} parent=1 // pred_check_branch
      %277 = sbr.rel (0) target = $region49
    $region48: #{tpu_custom_call.1} parent=1 // pred_region
      %279 = dma.done [#allocation5], 256
    $region49: #{tpu_custom_call.1} parent=1 // pred_fallthru
      _
    %280 = vsyncpa [#allocation4], 1
    %281 = vsyncpa [#allocation7], 1
    %282 = vsyncpa [#allocation5], 1

</llo_original>
